<compile_context>
chip_gen: v7x
topology: tpu7x:2x2x1
jax: 0.10.0
libtpu: 0.0.40
codegen_flags: <defaults>
</compile_context>

<pallas_src>
import functools

import jax
import jax.numpy as jnp
from jax.experimental import pallas as pl
from jax.experimental.pallas import tpu as pltpu

_LANES = 128


def _layernorm_kernel(alpha_ref, bias_ref, x_ref, o_ref, *, eps, n_valid):
    # x_ref: (tile_rows, hidden) block in VMEM.  The last block dim equals the
    # full hidden extent, so reductions over axis=-1 see only valid lanes (the
    # compiler masks vreg padding); no pad-lane correction is needed.
    x = x_ref[...].astype(jnp.float32)

    inv_n = 1.0 / n_valid
    mean = jnp.sum(x, axis=-1, keepdims=True) * inv_n               # (rows, 1)
    diff = x - mean                                                 # full tile
    sq = jnp.sum(diff * diff, axis=-1, keepdims=True)               # (rows, 1)

    # torch.std default: unbiased estimator (n-1); eps is added to std, not var.
    denom = n_valid - 1 if n_valid > 1 else 1  # torch gives NaN for n==1 anyway
    std = jnp.sqrt(sq * (1.0 / denom))
    # Per-row exact reciprocal: only (tile_rows, 1), so this costs nothing in
    # an HBM-bound kernel and keeps <1e-6 agreement with the reference.
    inv_std = pl.reciprocal(std + eps, approx=False)                # (rows, 1)
    scale = alpha_ref[0] * inv_std                                  # (rows, 1)

    # Exactly one full-tile FMA-equivalent + cast (lane-dense store).
    o_ref[...] = (diff * scale + bias_ref[0]).astype(o_ref.dtype)


def _tile_plan(rows, hidden, itemsize, tile_rows=None):
    """Pick tile_rows and the scoped-VMEM limit for this problem."""
    # Sublane packing: 8 rows for f32, 16 for bf16, 32 for int8/fp8.
    sublane = {4: 8, 2: 16, 1: 32}.get(itemsize, 8)
    # Lane-padded width of one row as it actually sits in VMEM vregs.
    hidden_lp = pl.cdiv(hidden, _LANES) * _LANES

    # VMEM bytes per tile row:
    #   2x input block (double-buffered) + 2x output block (double-buffered)
    #   + ~2 full-tile f32 temporaries (x.astype(f32) and diff).
    per_row_bytes = (2 + 2) * hidden_lp * itemsize + 2 * hidden_lp * 4

    if tile_rows is None:
        vmem_budget = 40 * 1024 * 1024     # headroom inside the 48 MiB limit
        target_in_bytes = 6 * 1024 * 1024  # ~6 MiB of raw input per grid step

        t_vmem = max(vmem_budget // per_row_bytes, 1)
        t_target = max(target_in_bytes // (hidden_lp * itemsize), 1)
        t = min(t_vmem, t_target)
        t = max(sublane, (t // sublane) * sublane)

        # No point in a block taller than the whole row extent.
        rows_up = pl.cdiv(rows, sublane) * sublane
        t = min(t, rows_up)

        # Keep the grid >= 2 steps for moderately large inputs so v7x's two
        # TensorCores can shard the "parallel" row axis; skip for tiny inputs
        # where the extra ~0.35 us grid step would dominate on single-TC chips.
        total_in_bytes = rows * hidden_lp * itemsize
        if rows > sublane and total_in_bytes > (2 * 1024 * 1024):
            half_up = pl.cdiv(pl.cdiv(rows, 2), sublane) * sublane
            t = min(t, half_up)
        tile_rows = max(t, sublane)

    # Scoped VMEM: 48 MiB covers the budgeted case on every generation (v7x has
    # 64 MiB physical, v5e/v6e 128 MiB).  For very wide hidden the tile bottoms
    # out at one sublane group and may need more than 48 MiB.
    # TODO(synk): for hidden so wide that one sublane-group block exceeds VMEM,
    # fall back to a two-pass (stats, then normalize) kernel tiled over hidden.
    estimate = tile_rows * per_row_bytes
    vmem_limit = max(48 * 1024 * 1024, estimate + 4 * 1024 * 1024)
    return tile_rows, vmem_limit


def layer_normalization(x, alpha, bias, eps=1e-6, tile_rows=None):
    """LayerNormalization forward matching the PyTorch module.

    x:     any shape (..., hidden); normalization over the last axis.
    alpha: shape (1,) scalar scale parameter.
    bias:  shape (1,) scalar shift parameter.
    """
    orig_shape = x.shape
    hidden = orig_shape[-1]
    rows = 1
    for d in orig_shape[:-1]:
        rows *= d
    x2d = x.reshape(rows, hidden)

    itemsize = jnp.dtype(x.dtype).itemsize
    tile_rows, vmem_limit = _tile_plan(rows, hidden, itemsize, tile_rows)

    # cdiv grid: Pallas masks boundary blocks, so no rows % tile_rows assert.
    grid = (pl.cdiv(rows, tile_rows),)

    kernel = functools.partial(_layernorm_kernel, eps=eps, n_valid=hidden)

    out2d = pl.pallas_call(
        kernel,
        out_shape=jax.ShapeDtypeStruct((rows, hidden), x.dtype),
        grid=grid,
        in_specs=[
            pl.BlockSpec(memory_space=pltpu.MemorySpace.SMEM),  # alpha (1,)
            pl.BlockSpec(memory_space=pltpu.MemorySpace.SMEM),  # bias  (1,)
            pl.BlockSpec((tile_rows, hidden), lambda i: (i, 0)),
        ],
        out_specs=pl.BlockSpec((tile_rows, hidden), lambda i: (i, 0)),
        compiler_params=pltpu.CompilerParams(
            dimension_semantics=("parallel",),
            vmem_limit_bytes=int(vmem_limit),
        ),
    )(alpha, bias, x2d)

    return out2d.reshape(orig_shape)


def layer_normalization_ref(x, alpha, bias, eps=1e-6):
    x32 = x.astype(jnp.float32)
    n = x.shape[-1]
    mean = jnp.mean(x32, axis=-1, keepdims=True)
    var = jnp.sum((x32 - mean) ** 2, axis=-1, keepdims=True) / max(n - 1, 1)
    std = jnp.sqrt(var)
    return (alpha[0] * (x32 - mean) / (std + eps) + bias[0]).astype(x.dtype)


if __name__ == "__main__":
    key = jax.random.PRNGKey(0)

    # Deterministic parameters matching nn.Parameter(torch.ones(1)) / zeros(1).
    alpha = jnp.ones((1,), dtype=jnp.float32)
    bias = jnp.zeros((1,), dtype=jnp.float32)

    cases = [
        # (shape, dtype, atol/rtol)
        ((2, 8, 32), jnp.float32, 1e-5),    # small hidden
        ((2, 4, 200), jnp.float32, 1e-5),   # non-128-multiple hidden (masked last lane group)
        ((3, 5, 128), jnp.bfloat16, 3e-2),  # bf16 I/O, ragged row count
    ]

    k = key
    for shape, dtype, tol in cases:
        k, sub = jax.random.split(k)
        x = jax.random.normal(sub, shape, dtype=jnp.float32).astype(dtype)
        out = layer_normalization(x, alpha, bias, eps=1e-6)
        out = jax.block_until_ready(out)
        ref = layer_normalization_ref(x, alpha, bias, eps=1e-6)
        assert out.shape == x.shape
        assert jnp.allclose(out.astype(jnp.float32), ref.astype(jnp.float32),
                            atol=tol, rtol=tol), f"mismatch vs reference {shape} {dtype}"

    print("KERNEL_OK")
</pallas_src>

<mosaic_0001>
module attributes {stable_mosaic.version = 11 : i64} {
  func.func @_layernorm_kernel(%arg0: i32, %arg1: memref<1xf32, #tpu.memory_space<smem>>, %arg2: memref<1xf32, #tpu.memory_space<smem>>, %arg3: memref<16x32xf32, #tpu.memory_space<vmem>>, %arg4: memref<16x32xf32, #tpu.memory_space<vmem>>) attributes {dimension_semantics = [#tpu.dimension_semantics<parallel>], iteration_bounds = array<i64: 1>, scalar_prefetch = 0 : i64, scratch_operands = 0 : i64, tpu.core_type = #tpu.core_type<tc>, window_params = [{transform_indices = @transform_0, window_bounds = array<i64: 1>}, {transform_indices = @transform_1, window_bounds = array<i64: 1>}, {transform_indices = @transform_2, window_bounds = array<i64: 16, 32>}, {transform_indices = @transform_3, window_bounds = array<i64: 16, 32>}]} {
    %c0 = arith.constant 0 : index
    %c0_0 = arith.constant 0 : index
    %0 = vector.load %arg3[%c0, %c0_0] : memref<16x32xf32, #tpu.memory_space<vmem>>, vector<16x32xf32>
    %cst = arith.constant dense<0.000000e+00> : vector<16xf32>
    %1 = vector.multi_reduction <add>, %0, %cst [1] : vector<16x32xf32> to vector<16xf32>
    %2 = vector.shape_cast %1 : vector<16xf32> to vector<16x1xf32>
    %cst_1 = arith.constant 3.125000e-02 : f32
    %3 = vector.broadcast %cst_1 : f32 to vector<16x1xf32>
    %4 = arith.mulf %2, %3 : vector<16x1xf32>
    %5 = vector.broadcast %4 : vector<16x1xf32> to vector<16x32xf32>
    %6 = arith.subf %0, %5 : vector<16x32xf32>
    %7 = arith.mulf %6, %6 : vector<16x32xf32>
    %cst_2 = arith.constant dense<0.000000e+00> : vector<16xf32>
    %8 = vector.multi_reduction <add>, %7, %cst_2 [1] : vector<16x32xf32> to vector<16xf32>
    %9 = vector.shape_cast %8 : vector<16xf32> to vector<16x1xf32>
    %cst_3 = arith.constant 0.0322580636 : f32
    %10 = vector.broadcast %cst_3 : f32 to vector<16x1xf32>
    %11 = arith.mulf %9, %10 : vector<16x1xf32>
    %12 = math.sqrt %11 : vector<16x1xf32>
    %cst_4 = arith.constant 9.99999997E-7 : f32
    %13 = vector.broadcast %cst_4 : f32 to vector<16x1xf32>
    %14 = arith.addf %12, %13 : vector<16x1xf32>
    %15 = tpu.reciprocal %14 : vector<16x1xf32> -> vector<16x1xf32>
    %c0_5 = arith.constant 0 : index
    %16 = memref.load %arg1[%c0_5] : memref<1xf32, #tpu.memory_space<smem>>
    %17 = vector.broadcast %16 : f32 to vector<16x1xf32>
    %18 = arith.mulf %17, %15 : vector<16x1xf32>
    %19 = vector.broadcast %18 : vector<16x1xf32> to vector<16x32xf32>
    %20 = arith.mulf %6, %19 : vector<16x32xf32>
    %c0_6 = arith.constant 0 : index
    %21 = memref.load %arg2[%c0_6] : memref<1xf32, #tpu.memory_space<smem>>
    %22 = vector.broadcast %21 : f32 to vector<16x32xf32>
    %23 = arith.addf %20, %22 : vector<16x32xf32>
    %c0_7 = arith.constant 0 : index
    %c0_8 = arith.constant 0 : index
    %24 = vector.load %arg4[%c0_7, %c0_8] : memref<16x32xf32, #tpu.memory_space<vmem>>, vector<16x32xf32>
    tpu.vector_store %arg4[%c0_7, %c0_8], %23 {strides = array<i32>} : memref<16x32xf32, #tpu.memory_space<vmem>>, vector<16x32xf32>,
    return
  }
  func.func @transform_0(%arg0: i32) -> i32 {
    %c0_i32 = arith.constant 0 : i32
    %c0_i32_0 = arith.constant 0 : i32
    return %c0_i32 : i32
  }
  func.func @transform_1(%arg0: i32) -> i32 {
    %c0_i32 = arith.constant 0 : i32
    %c0_i32_0 = arith.constant 0 : i32
    return %c0_i32 : i32
  }
  func.func @transform_2(%arg0: i32) -> (i32, i32) {
    %c0_i32 = arith.constant 0 : i32
    %c0_i32_0 = arith.constant 0 : i32
    return %arg0, %c0_i32 : i32, i32
  }
  func.func @transform_3(%arg0: i32) -> (i32, i32) {
    %c0_i32 = arith.constant 0 : i32
    %c0_i32_0 = arith.constant 0 : i32
    return %arg0, %c0_i32 : i32, i32
  }
}

</mosaic_0001>

<llo_original>
// kernel: tpu_custom_call.1
$region0: #{tpu_custom_call.1}
  #allocation0 [shape = 'u32[]', space=smem, size = 0x4, offset = 0x4, fixed_abs, tag = 'smem constant byte address 0x4 - core index']
  #allocation1 [shape = 'u32[144,128]{1,0:T(1,128)}', space=vmem, size = 0x12000, scoped, tag = 'internal scratch']
  #allocation2 [shape = 'f32[1]{0:T(128)S(6)}', space=smem, size = 0x200, scoped, tag = 'scoped memory for tpu_custom_call.1']
  #allocation3 [shape = 'f32[1]{0:T(128)S(6)}', space=smem, size = 0x200, scoped, tag = 'scoped memory for tpu_custom_call.1']
  %s0 = inlined_call_operand.<no memory space> [shape: f32[1], index: 0, kind: input, shape index: {}]
  %s1 = inlined_call_operand.<no memory space> [shape: f32[1], index: 1, kind: input, shape index: {}]
  %s2 = inlined_call_operand.hbm [shape: f32[16,32], index: 2, kind: input, shape index: {}]
  %s3 = inlined_call_operand.hbm [shape: f32[16,32], index: 3, kind: output, shape index: {}]
  %s4 = sld [smem:[#allocation0]]
  $region26: #{tpu_custom_call.1} parent=0
    _
  %s6 = ssub.s32 1, %s4
  %s7 = scalar_select 0, %s6, %s4
  %8 = sst [smem:[#allocation2]] %s0
  %9 = sst [smem:[#allocation3]] %s1
  $region1: #{tpu_custom_call.1} parent=0
    #allocation4 [shape = 'u8[8192]{0}', space=vmem, size = 0x2000, scoped, tag = 'input window, operand 2, single buffered']
    #allocation5 [shape = 's32[1]{0}', space=sflag, size = 0x4, scoped, tag = 'scoped memory for tpu_custom_call.1']
    #allocation6 [shape = 's32[1]{0}', space=sflag, size = 0x4, scoped, tag = 'scoped memory for tpu_custom_call.1']
    #allocation7 [shape = 'u8[8192]{0}', space=vmem, size = 0x2000, scoped, tag = 'output window, operand 0, single buffered']
    %10 = vsyncpa [#allocation5], 0
    %11 = vsyncpa [#allocation6], 0
    // Predicated region
    $region2: #{tpu_custom_call.1} parent=1 // pred_check
      _
    $region3: #{tpu_custom_call.1} parent=1 // pred_check_branch
      %13 = sbr.rel (0) target = $region5
    $region4: #{tpu_custom_call.1} parent=1 // pred_region
      _
    $region5: #{tpu_custom_call.1} parent=1 // pred_fallthru
      _
    // Predicated region
    $region6: #{tpu_custom_call.1} parent=1 // pred_check
      _
    $region7: #{tpu_custom_call.1} parent=1 // pred_check_branch
      %15 = sbr.rel (0) target = $region9
    $region8: #{tpu_custom_call.1} parent=1 // pred_region
      _
    $region9: #{tpu_custom_call.1} parent=1 // pred_fallthru
      _
    // Predicated region
    $region10: #{tpu_custom_call.1} parent=1 // pred_check
      _
    $region11: #{tpu_custom_call.1} parent=1 // pred_check_branch
      %17 = sbr.rel (0) target = $region13
    $region12: #{tpu_custom_call.1} parent=1 // pred_region
      %s19 = ssub.s32 256, 256
      %20 = vsyncadd [#allocation5], %s19
      %s21 = sshll.u32 [#allocation4], 4
      %s22 = int_to_ptr.vmem [resolvable:$true] %s21
      %27 = dma.hbm_to_vmem [thread:$0]  %s2, 256, %s22, [#allocation5], 128, 128, 8
    $region13: #{tpu_custom_call.1} parent=1 // pred_fallthru
      _
    // Predicated region
    $region14: #{tpu_custom_call.1} parent=1 // pred_check
      _
    $region15: #{tpu_custom_call.1} parent=1 // pred_check_branch
      %29 = sbr.rel (0) target = $region17
    $region16: #{tpu_custom_call.1} parent=1 // pred_region
      %30 = dma.done [#allocation5], 256
    $region17: #{tpu_custom_call.1} parent=1 // pred_fallthru
      _
    %v31 = vld [vmem:[#allocation4] sm:$0xff]
    %v32 = vld [vmem:[#allocation4 + $0x8] sm:$0xff]
    %vm33 = vcmask 261120
    %v34 = vsel %vm33, %v31, 0.0
    %35 = vadd.xlane.f32.xlu0 %v34
    %v36 = vpop.xlane.xlu0 %35
    %v37 = vsel %vm33, %v32, 0.0
    %38 = vadd.xlane.f32.xlu0 %v37
    %v39 = vpop.xlane.xlu0 %38
    %v40 = vmul.f32 %v36, 0.03125
    %v41 = vmul.f32 %v39, 0.03125
    %v42 = vsub.f32 %v31, %v40
    %v43 = vsub.f32 %v32, %v41
    %v44 = vmul.f32 %v42, %v42
    %v45 = vmul.f32 %v43, %v43
    %v46 = vsel %vm33, %v44, 0.0
    %47 = vadd.xlane.f32.xlu0 %v46
    %v48 = vpop.xlane.xlu0 %47
    %v49 = vsel %vm33, %v45, 0.0
    %50 = vadd.xlane.f32.xlu0 %v49
    %v51 = vpop.xlane.xlu0 %50
    %v52 = vmul.f32 %v48, 0.032258064
    %v53 = vmul.f32 %v51, 0.032258064
    %v54 = vrsqrt.pop %v52
    %v55 = vmul.f32 %v52, %v54
    %vm56 = vcmp.eq.f32.partialorder %v52, inf
    %v57 = vsel %vm56, %v52, %v55
    %vm58 = vcmp.eq.f32.partialorder %v52, 0.0
    %v59 = vand.u32 %v52, 2147483648
    %v60 = vsel %vm58, %v59, %v57
    %v61 = vrsqrt.pop %v53
    %v62 = vmul.f32 %v53, %v61
    %vm63 = vcmp.eq.f32.partialorder %v53, inf
    %v64 = vsel %vm63, %v53, %v62
    %vm65 = vcmp.eq.f32.partialorder %v53, 0.0
    %v66 = vand.u32 %v53, 2147483648
    %v67 = vsel %vm65, %v66, %v64
    %v68 = vadd.f32 %v60, 1e-06
    %v69 = vadd.f32 %v67, 1e-06
    %v70 = vrcp.pop %v68
    %v71 = vrcp.pop %v69
    %s72 = sld [smem:[#allocation2]]
    %v73 = vstv %s72
    %v74 = vmul.f32 %v73, %v70
    %v75 = vmul.f32 %v73, %v71
    %v76 = vmul.f32 %v42, %v74
    %v77 = vmul.f32 %v43, %v75
    %s78 = sld [smem:[#allocation3]]
    %v79 = vstv %s78
    %v80 = vadd.f32 %v76, %v79
    %v81 = vadd.f32 %v77, %v79
    %82 = vst.msk [vmem:[#allocation7] sm:$0xff] %vm33, %v80
    %83 = vst.msk [vmem:[#allocation7 + $0x8] sm:$0xff] %vm33, %v81
    // Predicated region
    $region18: #{tpu_custom_call.1} parent=1 // pred_check
      _
    $region19: #{tpu_custom_call.1} parent=1 // pred_check_branch
      %85 = sbr.rel (0) target = $region21
    $region20: #{tpu_custom_call.1} parent=1 // pred_region
      %s87 = ssub.s32 256, 256
      %88 = vsyncadd [#allocation6], %s87
      %s89 = sshll.u32 [#allocation7], 4
      %s90 = int_to_ptr.vmem [resolvable:$true] %s89
      %95 = dma.vmem_to_hbm [thread:$0]  %s90, 256, %s3, [#allocation6], 128, 128, 8
    $region21: #{tpu_custom_call.1} parent=1 // pred_fallthru
      _
    // Predicated region
    $region22: #{tpu_custom_call.1} parent=1 // pred_check
      _
    $region23: #{tpu_custom_call.1} parent=1 // pred_check_branch
      %97 = sbr.rel (0) target = $region25
    $region24: #{tpu_custom_call.1} parent=1 // pred_region
      %98 = dma.done [#allocation6], 256
    $region25: #{tpu_custom_call.1} parent=1 // pred_fallthru
      _
    %99 = vsyncpa [#allocation5], 1
    %100 = vsyncpa [#allocation6], 1

</llo_original>
